<compile_context>
chip_gen: v5e
topology: v5e:2x2
jax: 0.10.0
libtpu: 0.0.40
codegen_flags: <defaults>
</compile_context>

<pallas_src>
import functools
import math

import jax
import jax.numpy as jnp
from jax.experimental import pallas as pl
from jax.experimental.pallas import tpu as pltpu


def _attention_kernel(q_ref, k_ref, v_ref, mask_ref, o_ref, *, heads, scale):
    """One batch row per grid step; all heads processed inside.

    q_ref: (q_len, embed)   k_ref/v_ref: (k_len, embed)
    mask_ref: (q_len, k_len) (head-invariant)   o_ref: (q_len, embed)
    """
    q_len, embed = q_ref.shape
    head_dim = embed // heads

    # Fold the 1/sqrt(embed) scale into q (cheaper than scaling the q*k energy).
    q = q_ref[...] * jnp.asarray(scale, dtype=q_ref.dtype)
    k = k_ref[...]
    v = v_ref[...]
    masked = mask_ref[...] == 0  # (q_len, k_len), hoisted out of the head loop

    head_outs = []
    for h in range(heads):  # heads is small & static -> fully unrolled
        lo = h * head_dim
        qh = q[:, lo:lo + head_dim]
        kh = k[:, lo:lo + head_dim]
        vh = v[:, lo:lo + head_dim]

        # energy = qh @ kh^T with f32 accumulation on the MXU.
        s = jax.lax.dot_general(
            qh, kh, (((1,), (1,)), ((), ())),
            preferred_element_type=jnp.float32)
        # masked_fill(mask == 0, -1e20); (-1e20 underflows to 0 prob either way)
        s = jnp.where(masked, jnp.float32(-1e20), s)

        # Numerically-stable softmax with deferred normalization:
        # softmax(s) @ v == (exp(s - m) @ v) * 1/sum(exp(s - m))
        p = jnp.exp(s - jnp.max(s, axis=-1, keepdims=True))
        l = jnp.sum(p, axis=-1, keepdims=True)  # (q_len, 1)

        o_h = jnp.dot(p.astype(v.dtype), vh,
                      preferred_element_type=jnp.float32)
        head_outs.append(o_h * pl.reciprocal(l, approx=False))

    # Concatenated heads, already in (q_len, heads*head_dim) order.
    out = jnp.concatenate(head_outs, axis=-1)
    o_ref[...] = out.astype(o_ref.dtype)


def _fc_out_kernel(x_ref, w_ref, b_ref, o_ref, acc_ref):
    """Tiled y = x @ W^T + b with a VMEM f32 accumulator (PyTorch W is (out, in))."""
    @pl.when(pl.program_id(2) == 0)
    def _():
        acc_ref[...] = jnp.zeros_like(acc_ref)

    acc_ref[...] += jax.lax.dot_general(
        x_ref[...], w_ref[...],
        dimension_numbers=(((1,), (1,)), ((), ())),  # contract x[k] with w[k]
        preferred_element_type=jnp.float32)

    @pl.when(pl.program_id(2) == pl.num_programs(2) - 1)
    def _():
        o_ref[...] = (acc_ref[...] + b_ref[...].astype(jnp.float32)
                      ).astype(o_ref.dtype)


def _normalize_mask(mask, N, q_len, k_len):
    """Normalize a broadcastable mask to a head-invariant (Nm, q_len, k_len)."""
    mask = jnp.asarray(mask)
    if mask.ndim == 2:
        m = mask[None]
    elif mask.ndim == 3:
        m = mask
    elif mask.ndim == 4:
        if mask.shape[1] != 1:
            raise NotImplementedError("per-head masks not supported")
        m = mask[:, 0]
    else:
        raise ValueError("mask rank must be 2, 3 or 4")
    nm = m.shape[0]
    if nm not in (1, N):
        raise ValueError("mask batch dim must be 1 or N")
    return jnp.broadcast_to(m, (nm, q_len, k_len)), nm


def _pick_tile(dim, target):
    # Use the target tile if it divides the dim evenly, else fall back to full.
    return target if (dim > target and dim % target == 0) else dim


def multi_head_attention(values, keys, query, mask, fc_w, fc_b, *, heads):
    """values/keys/query: (N, len, embed); mask broadcastable to (N, heads, q, k)
    (head-invariant).  fc_w: (embed, embed) PyTorch-convention weight
    (y = x @ W.T + b); fc_b: (embed,)."""
    N, q_len, embed = query.shape
    k_len = keys.shape[1]
    v_len = values.shape[1]
    head_dim = embed // heads
    assert head_dim * heads == embed
    assert v_len == k_len, "value_len must equal key_len"

    mask3, nm = _normalize_mask(mask, N, q_len, k_len)
    mask_index = (lambda n: (n, 0, 0)) if nm == N else (lambda n: (0, 0, 0))

    scale = 1.0 / (float(embed) ** 0.5)

    # ---- attention: one batch row per grid step, lane-dense (seq, embed) blocks
    attn_out = pl.pallas_call(
        functools.partial(_attention_kernel, heads=heads, scale=scale),
        out_shape=jax.ShapeDtypeStruct((N, q_len, embed), query.dtype),
        grid=(N,),
        in_specs=[
            pl.BlockSpec((None, q_len, embed), lambda n: (n, 0, 0)),
            pl.BlockSpec((None, k_len, embed), lambda n: (n, 0, 0)),
            pl.BlockSpec((None, v_len, embed), lambda n: (n, 0, 0)),
            pl.BlockSpec((None, q_len, k_len), mask_index),
        ],
        out_specs=pl.BlockSpec((None, q_len, embed), lambda n: (n, 0, 0)),
        compiler_params=pltpu.CompilerParams(
            dimension_semantics=("parallel",)),
    )(query, keys, values, mask3)

    # Heads are already concatenated along embed — just merge (N, q_len).
    x2d = attn_out.reshape(N * q_len, embed)

    # ---- fc_out: tiled matmul (256-aligned tiles where the shape allows)
    M, K = x2d.shape
    n_out = fc_w.shape[0]
    tm = _pick_tile(M, 256)
    tn = _pick_tile(n_out, 256)
    tk = _pick_tile(K, 512)

    out2d = pl.pallas_call(
        _fc_out_kernel,
        out_shape=jax.ShapeDtypeStruct((M, n_out), query.dtype),
        grid=(M // tm, n_out // tn, K // tk),
        in_specs=[
            pl.BlockSpec((tm, tk), lambda i, j, kk: (i, kk)),
            pl.BlockSpec((tn, tk), lambda i, j, kk: (j, kk)),
            pl.BlockSpec((1, tn), lambda i, j, kk: (0, j)),
        ],
        out_specs=pl.BlockSpec((tm, tn), lambda i, j, kk: (i, j)),
        scratch_shapes=[pltpu.VMEM((tm, tn), jnp.float32)],
        compiler_params=pltpu.CompilerParams(
            dimension_semantics=("parallel", "parallel", "arbitrary")),
    )(x2d, fc_w, fc_b.reshape(1, n_out))

    return out2d.reshape(N, q_len, embed)


def _reference(values, keys, query, mask, fc_w, fc_b, *, heads):
    # Pure-JAX reference mirroring the PyTorch forward exactly.
    N, q_len, embed = query.shape
    k_len = keys.shape[1]
    head_dim = embed // heads
    v = values.reshape(N, -1, heads, head_dim)
    k = keys.reshape(N, k_len, heads, head_dim)
    q = query.reshape(N, q_len, heads, head_dim)
    energy = jnp.einsum("nqhd,nkhd->nhqk", q, k)
    energy = jnp.where(jnp.broadcast_to(mask, energy.shape) == 0, -1e20, energy)
    attn = jax.nn.softmax(energy / (embed ** 0.5), axis=3)
    out = jnp.einsum("nhql,nlhd->nqhd", attn, v).reshape(N, q_len, embed)
    return out @ fc_w.T + fc_b


if __name__ == "__main__":
    N, seq, embed, heads = 2, 8, 32, 4

    key = jax.random.PRNGKey(0)
    kv_key, k_key, q_key, w_key, b_key = jax.random.split(key, 5)

    values = jax.random.normal(kv_key, (N, seq, embed), dtype=jnp.float32)
    keys_in = jax.random.normal(k_key, (N, seq, embed), dtype=jnp.float32)
    query = jax.random.normal(q_key, (N, seq, embed), dtype=jnp.float32)

    # Causal mask, broadcastable to (N, heads, q_len, k_len).
    mask = jnp.tril(jnp.ones((seq, seq), dtype=jnp.float32))[None, None]

    # Deterministic fc_out parameters (PyTorch Linear convention).
    bound = 1.0 / math.sqrt(embed)
    fc_w = jax.random.uniform(
        w_key, (embed, embed), minval=-bound, maxval=bound, dtype=jnp.float32
    )
    fc_b = jax.random.uniform(
        b_key, (embed,), minval=-bound, maxval=bound, dtype=jnp.float32
    )

    out = multi_head_attention(
        values, keys_in, query, mask, fc_w, fc_b, heads=heads
    )
    out = jax.block_until_ready(out)

    ref = _reference(values, keys_in, query, mask, fc_w, fc_b, heads=heads)
    assert out.shape == (N, seq, embed)
    assert jnp.allclose(out, ref, atol=1e-4, rtol=1e-4)

    print("KERNEL_OK")
</pallas_src>

<mosaic_0001>
module attributes {stable_mosaic.version = 11 : i64} {
  func.func @_attention_kernel(%arg0: i32, %arg1: memref<1x8x32xf32, #tpu.memory_space<vmem>>, %arg2: memref<1x8x32xf32, #tpu.memory_space<vmem>>, %arg3: memref<1x8x32xf32, #tpu.memory_space<vmem>>, %arg4: memref<1x8x8xf32, #tpu.memory_space<vmem>>, %arg5: memref<1x8x32xf32, #tpu.memory_space<vmem>>) attributes {dimension_semantics = [#tpu.dimension_semantics<parallel>], iteration_bounds = array<i64: 2>, scalar_prefetch = 0 : i64, scratch_operands = 0 : i64, tpu.core_type = #tpu.core_type<tc>, window_params = [{transform_indices = @transform_0, window_bounds = array<i64: 1, 8, 32>}, {transform_indices = @transform_1, window_bounds = array<i64: 1, 8, 32>}, {transform_indices = @transform_2, window_bounds = array<i64: 1, 8, 32>}, {pipeline_mode = #tpu.pipeline_mode<synchronous>, transform_indices = @transform_3, window_bounds = array<i64: 1, 8, 8>}, {transform_indices = @transform_4, window_bounds = array<i64: 1, 8, 32>}]} {
    %c0 = arith.constant 0 : index
    %c0_0 = arith.constant 0 : index
    %c0_1 = arith.constant 0 : index
    %0 = vector.load %arg1[%c0, %c0_0, %c0_1] : memref<1x8x32xf32, #tpu.memory_space<vmem>>, vector<1x8x32xf32>
    %1 = vector.shape_cast %0 : vector<1x8x32xf32> to vector<8x32xf32>
    %cst = arith.constant 0.176776692 : f32
    %2 = vector.broadcast %cst : f32 to vector<8x32xf32>
    %3 = arith.mulf %1, %2 : vector<8x32xf32>
    %c0_2 = arith.constant 0 : index
    %c0_3 = arith.constant 0 : index
    %c0_4 = arith.constant 0 : index
    %4 = vector.load %arg2[%c0_2, %c0_3, %c0_4] : memref<1x8x32xf32, #tpu.memory_space<vmem>>, vector<1x8x32xf32>
    %5 = vector.shape_cast %4 : vector<1x8x32xf32> to vector<8x32xf32>
    %c0_5 = arith.constant 0 : index
    %c0_6 = arith.constant 0 : index
    %c0_7 = arith.constant 0 : index
    %6 = vector.load %arg3[%c0_5, %c0_6, %c0_7] : memref<1x8x32xf32, #tpu.memory_space<vmem>>, vector<1x8x32xf32>
    %7 = vector.shape_cast %6 : vector<1x8x32xf32> to vector<8x32xf32>
    %c0_8 = arith.constant 0 : index
    %c0_9 = arith.constant 0 : index
    %c0_10 = arith.constant 0 : index
    %8 = vector.load %arg4[%c0_8, %c0_9, %c0_10] : memref<1x8x8xf32, #tpu.memory_space<vmem>>, vector<1x8x8xf32>
    %9 = vector.shape_cast %8 : vector<1x8x8xf32> to vector<8x8xf32>
    %cst_11 = arith.constant 0.000000e+00 : f32
    %10 = vector.broadcast %cst_11 : f32 to vector<8x8xf32>
    %11 = arith.cmpf oeq, %9, %10 : vector<8x8xf32>
    %12 = vector.extract_strided_slice %3 {offsets = [0, 0], sizes = [8, 8], strides = [1, 1]} : vector<8x32xf32> to vector<8x8xf32>
    %13 = vector.extract_strided_slice %5 {offsets = [0, 0], sizes = [8, 8], strides = [1, 1]} : vector<8x32xf32> to vector<8x8xf32>
    %14 = vector.extract_strided_slice %7 {offsets = [0, 0], sizes = [8, 8], strides = [1, 1]} : vector<8x32xf32> to vector<8x8xf32>
    %cst_12 = arith.constant dense<0.000000e+00> : vector<8x8xf32>
    %15 = tpu.matmul %12, %13, %cst_12 {dimension_numbers = #tpu.dot_dimension_numbers<[1], [1], [0], [0], [0, 0, 1, 0], [], []>} : vector<8x8xf32>, vector<8x8xf32>, vector<8x8xf32> -> vector<8x8xf32>
    %cst_13 = arith.constant -1.000000e+20 : f32
    %16 = vector.broadcast %cst_13 : f32 to vector<8x8xf32>
    %17 = arith.select %11, %16, %15 : vector<8x8xi1>, vector<8x8xf32>
    %cst_14 = arith.constant dense<0xFF800000> : vector<8xf32>
    %18 = vector.multi_reduction <maximumf>, %17, %cst_14 [1] : vector<8x8xf32> to vector<8xf32>
    %19 = vector.shape_cast %18 : vector<8xf32> to vector<8x1xf32>
    %20 = vector.broadcast %19 : vector<8x1xf32> to vector<8x8xf32>
    %21 = arith.subf %17, %20 : vector<8x8xf32>
    %22 = math.exp %21 : vector<8x8xf32>
    %cst_15 = arith.constant dense<0.000000e+00> : vector<8xf32>
    %23 = vector.multi_reduction <add>, %22, %cst_15 [1] : vector<8x8xf32> to vector<8xf32>
    %24 = vector.shape_cast %23 : vector<8xf32> to vector<8x1xf32>
    %cst_16 = arith.constant dense<0.000000e+00> : vector<8x8xf32>
    %25 = tpu.matmul %22, %14, %cst_16 {dimension_numbers = #tpu.dot_dimension_numbers<[1], [0], [0], [1], [0, 0, 1, 1], [], []>} : vector<8x8xf32>, vector<8x8xf32>, vector<8x8xf32> -> vector<8x8xf32>
    %26 = tpu.reciprocal %24 : vector<8x1xf32> -> vector<8x1xf32>
    %27 = vector.broadcast %26 : vector<8x1xf32> to vector<8x8xf32>
    %28 = arith.mulf %25, %27 : vector<8x8xf32>
    %29 = vector.extract_strided_slice %3 {offsets = [0, 8], sizes = [8, 8], strides = [1, 1]} : vector<8x32xf32> to vector<8x8xf32>
    %30 = vector.extract_strided_slice %5 {offsets = [0, 8], sizes = [8, 8], strides = [1, 1]} : vector<8x32xf32> to vector<8x8xf32>
    %31 = vector.extract_strided_slice %7 {offsets = [0, 8], sizes = [8, 8], strides = [1, 1]} : vector<8x32xf32> to vector<8x8xf32>
    %cst_17 = arith.constant dense<0.000000e+00> : vector<8x8xf32>
    %32 = tpu.matmul %29, %30, %cst_17 {dimension_numbers = #tpu.dot_dimension_numbers<[1], [1], [0], [0], [0, 0, 1, 0], [], []>} : vector<8x8xf32>, vector<8x8xf32>, vector<8x8xf32> -> vector<8x8xf32>
    %cst_18 = arith.constant -1.000000e+20 : f32
    %33 = vector.broadcast %cst_18 : f32 to vector<8x8xf32>
    %34 = arith.select %11, %33, %32 : vector<8x8xi1>, vector<8x8xf32>
    %cst_19 = arith.constant dense<0xFF800000> : vector<8xf32>
    %35 = vector.multi_reduction <maximumf>, %34, %cst_19 [1] : vector<8x8xf32> to vector<8xf32>
    %36 = vector.shape_cast %35 : vector<8xf32> to vector<8x1xf32>
    %37 = vector.broadcast %36 : vector<8x1xf32> to vector<8x8xf32>
    %38 = arith.subf %34, %37 : vector<8x8xf32>
    %39 = math.exp %38 : vector<8x8xf32>
    %cst_20 = arith.constant dense<0.000000e+00> : vector<8xf32>
    %40 = vector.multi_reduction <add>, %39, %cst_20 [1] : vector<8x8xf32> to vector<8xf32>
    %41 = vector.shape_cast %40 : vector<8xf32> to vector<8x1xf32>
    %cst_21 = arith.constant dense<0.000000e+00> : vector<8x8xf32>
    %42 = tpu.matmul %39, %31, %cst_21 {dimension_numbers = #tpu.dot_dimension_numbers<[1], [0], [0], [1], [0, 0, 1, 1], [], []>} : vector<8x8xf32>, vector<8x8xf32>, vector<8x8xf32> -> vector<8x8xf32>
    %43 = tpu.reciprocal %41 : vector<8x1xf32> -> vector<8x1xf32>
    %44 = vector.broadcast %43 : vector<8x1xf32> to vector<8x8xf32>
    %45 = arith.mulf %42, %44 : vector<8x8xf32>
    %46 = vector.extract_strided_slice %3 {offsets = [0, 16], sizes = [8, 8], strides = [1, 1]} : vector<8x32xf32> to vector<8x8xf32>
    %47 = vector.extract_strided_slice %5 {offsets = [0, 16], sizes = [8, 8], strides = [1, 1]} : vector<8x32xf32> to vector<8x8xf32>
    %48 = vector.extract_strided_slice %7 {offsets = [0, 16], sizes = [8, 8], strides = [1, 1]} : vector<8x32xf32> to vector<8x8xf32>
    %cst_22 = arith.constant dense<0.000000e+00> : vector<8x8xf32>
    %49 = tpu.matmul %46, %47, %cst_22 {dimension_numbers = #tpu.dot_dimension_numbers<[1], [1], [0], [0], [0, 0, 1, 0], [], []>} : vector<8x8xf32>, vector<8x8xf32>, vector<8x8xf32> -> vector<8x8xf32>
    %cst_23 = arith.constant -1.000000e+20 : f32
    %50 = vector.broadcast %cst_23 : f32 to vector<8x8xf32>
    %51 = arith.select %11, %50, %49 : vector<8x8xi1>, vector<8x8xf32>
    %cst_24 = arith.constant dense<0xFF800000> : vector<8xf32>
    %52 = vector.multi_reduction <maximumf>, %51, %cst_24 [1] : vector<8x8xf32> to vector<8xf32>
    %53 = vector.shape_cast %52 : vector<8xf32> to vector<8x1xf32>
    %54 = vector.broadcast %53 : vector<8x1xf32> to vector<8x8xf32>
    %55 = arith.subf %51, %54 : vector<8x8xf32>
    %56 = math.exp %55 : vector<8x8xf32>
    %cst_25 = arith.constant dense<0.000000e+00> : vector<8xf32>
    %57 = vector.multi_reduction <add>, %56, %cst_25 [1] : vector<8x8xf32> to vector<8xf32>
    %58 = vector.shape_cast %57 : vector<8xf32> to vector<8x1xf32>
    %cst_26 = arith.constant dense<0.000000e+00> : vector<8x8xf32>
    %59 = tpu.matmul %56, %48, %cst_26 {dimension_numbers = #tpu.dot_dimension_numbers<[1], [0], [0], [1], [0, 0, 1, 1], [], []>} : vector<8x8xf32>, vector<8x8xf32>, vector<8x8xf32> -> vector<8x8xf32>
    %60 = tpu.reciprocal %58 : vector<8x1xf32> -> vector<8x1xf32>
    %61 = vector.broadcast %60 : vector<8x1xf32> to vector<8x8xf32>
    %62 = arith.mulf %59, %61 : vector<8x8xf32>
    %63 = vector.extract_strided_slice %3 {offsets = [0, 24], sizes = [8, 8], strides = [1, 1]} : vector<8x32xf32> to vector<8x8xf32>
    %64 = vector.extract_strided_slice %5 {offsets = [0, 24], sizes = [8, 8], strides = [1, 1]} : vector<8x32xf32> to vector<8x8xf32>
    %65 = vector.extract_strided_slice %7 {offsets = [0, 24], sizes = [8, 8], strides = [1, 1]} : vector<8x32xf32> to vector<8x8xf32>
    %cst_27 = arith.constant dense<0.000000e+00> : vector<8x8xf32>
    %66 = tpu.matmul %63, %64, %cst_27 {dimension_numbers = #tpu.dot_dimension_numbers<[1], [1], [0], [0], [0, 0, 1, 0], [], []>} : vector<8x8xf32>, vector<8x8xf32>, vector<8x8xf32> -> vector<8x8xf32>
    %cst_28 = arith.constant -1.000000e+20 : f32
    %67 = vector.broadcast %cst_28 : f32 to vector<8x8xf32>
    %68 = arith.select %11, %67, %66 : vector<8x8xi1>, vector<8x8xf32>
    %cst_29 = arith.constant dense<0xFF800000> : vector<8xf32>
    %69 = vector.multi_reduction <maximumf>, %68, %cst_29 [1] : vector<8x8xf32> to vector<8xf32>
    %70 = vector.shape_cast %69 : vector<8xf32> to vector<8x1xf32>
    %71 = vector.broadcast %70 : vector<8x1xf32> to vector<8x8xf32>
    %72 = arith.subf %68, %71 : vector<8x8xf32>
    %73 = math.exp %72 : vector<8x8xf32>
    %cst_30 = arith.constant dense<0.000000e+00> : vector<8xf32>
    %74 = vector.multi_reduction <add>, %73, %cst_30 [1] : vector<8x8xf32> to vector<8xf32>
    %75 = vector.shape_cast %74 : vector<8xf32> to vector<8x1xf32>
    %cst_31 = arith.constant dense<0.000000e+00> : vector<8x8xf32>
    %76 = tpu.matmul %73, %65, %cst_31 {dimension_numbers = #tpu.dot_dimension_numbers<[1], [0], [0], [1], [0, 0, 1, 1], [], []>} : vector<8x8xf32>, vector<8x8xf32>, vector<8x8xf32> -> vector<8x8xf32>
    %77 = tpu.reciprocal %75 : vector<8x1xf32> -> vector<8x1xf32>
    %78 = vector.broadcast %77 : vector<8x1xf32> to vector<8x8xf32>
    %79 = arith.mulf %76, %78 : vector<8x8xf32>
    %80 = tpu.concatenate %28, %45, %62, %79 in 1 : vector<8x8xf32>, vector<8x8xf32>, vector<8x8xf32>, vector<8x8xf32> -> vector<8x32xf32>
    %c0_32 = arith.constant 0 : index
    %c0_33 = arith.constant 0 : index
    %c0_34 = arith.constant 0 : index
    %81 = vector.load %arg5[%c0_32, %c0_33, %c0_34] : memref<1x8x32xf32, #tpu.memory_space<vmem>>, vector<1x8x32xf32>
    %82 = vector.shape_cast %81 : vector<1x8x32xf32> to vector<8x32xf32>
    %83 = vector.shape_cast %80 : vector<8x32xf32> to vector<1x8x32xf32>
    tpu.vector_store %arg5[%c0_32, %c0_33, %c0_34], %83 {strides = array<i32>} : memref<1x8x32xf32, #tpu.memory_space<vmem>>, vector<1x8x32xf32>,
    return
  }
  func.func @transform_0(%arg0: i32) -> (i32, i32, i32) {
    %c0_i32 = arith.constant 0 : i32
    %c0_i32_0 = arith.constant 0 : i32
    %c0_i32_1 = arith.constant 0 : i32
    return %arg0, %c0_i32, %c0_i32_0 : i32, i32, i32
  }
  func.func @transform_1(%arg0: i32) -> (i32, i32, i32) {
    %c0_i32 = arith.constant 0 : i32
    %c0_i32_0 = arith.constant 0 : i32
    %c0_i32_1 = arith.constant 0 : i32
    return %arg0, %c0_i32, %c0_i32_0 : i32, i32, i32
  }
  func.func @transform_2(%arg0: i32) -> (i32, i32, i32) {
    %c0_i32 = arith.constant 0 : i32
    %c0_i32_0 = arith.constant 0 : i32
    %c0_i32_1 = arith.constant 0 : i32
    return %arg0, %c0_i32, %c0_i32_0 : i32, i32, i32
  }
  func.func @transform_3(%arg0: i32) -> (i32, i32, i32) {
    %c0_i32 = arith.constant 0 : i32
    %c0_i32_0 = arith.constant 0 : i32
    %c0_i32_1 = arith.constant 0 : i32
    %c0_i32_2 = arith.constant 0 : i32
    return %c0_i32, %c0_i32_0, %c0_i32_1 : i32, i32, i32
  }
  func.func @transform_4(%arg0: i32) -> (i32, i32, i32) {
    %c0_i32 = arith.constant 0 : i32
    %c0_i32_0 = arith.constant 0 : i32
    %c0_i32_1 = arith.constant 0 : i32
    return %arg0, %c0_i32, %c0_i32_0 : i32, i32, i32
  }
}

</mosaic_0001>

<llo_original>
// kernel: tpu_custom_call.1
$region0: #{tpu_custom_call.1}
  #allocation0 [shape = 'u32[]', space=smem, size = 0x4, offset = 0x4, fixed_abs, tag = 'smem constant byte address 0x4 - core index']
  #allocation1 [shape = 'u32[72,128]{1,0:T(1,128)}', space=vmem, size = 0x9000, scoped, tag = 'internal scratch']
  %s0 = inlined_call_operand.hbm [shape: f32[2,8,32], index: 0, kind: input, shape index: {}]
  %s1 = inlined_call_operand.hbm [shape: f32[2,8,32], index: 1, kind: input, shape index: {}]
  %s2 = inlined_call_operand.hbm [shape: f32[2,8,32], index: 2, kind: input, shape index: {}]
  %s3 = inlined_call_operand.hbm [shape: f32[1,8,8], index: 3, kind: input, shape index: {}]
  %s4 = inlined_call_operand.hbm [shape: f32[2,8,32], index: 4, kind: output, shape index: {}]
  %s5 = sld [smem:[#allocation0]]
  $region65: #{tpu_custom_call.1} parent=0
    _
  %s7 = ssub.s32 1, %s5
  %s8 = scalar_select 0, %s7, %s5
  $region1: #{tpu_custom_call.1} parent=0
    #allocation2 [shape = 'u8[8192]{0}', space=vmem, size = 0x2000, scoped, tag = 'input window, operand 0']
    #allocation3 [shape = 's32[2]{0}', space=sflag, size = 0x8, scoped, tag = 'scoped memory for tpu_custom_call.1']
    #allocation4 [shape = 's32[2]{0}', space=sflag, size = 0x8, scoped, tag = 'scoped memory for tpu_custom_call.1']
    #allocation5 [shape = 'u8[8192]{0}', space=vmem, size = 0x2000, scoped, tag = 'input window, operand 1']
    #allocation6 [shape = 's32[2]{0}', space=sflag, size = 0x8, scoped, tag = 'scoped memory for tpu_custom_call.1']
    #allocation7 [shape = 'u8[8192]{0}', space=vmem, size = 0x2000, scoped, tag = 'input window, operand 2']
    #allocation8 [shape = 'u8[4096]{0}', space=vmem, size = 0x1000, scoped, tag = 'input window, operand 3, single buffered']
    #allocation9 [shape = 's32[1]{0}', space=sflag, size = 0x4, scoped, tag = 'scoped memory for tpu_custom_call.1']
    #allocation10 [shape = 'u8[8192]{0}', space=vmem, size = 0x2000, scoped, tag = 'output window, operand 0']
    %9 = vsyncpa [#allocation3], 0
    %s10 = scalar_lea.sflag [#allocation3], 1
    %11 = vsyncpa %s10, 0
    %12 = vsyncpa [#allocation6], 0
    %s13 = scalar_lea.sflag [#allocation6], 1
    %14 = vsyncpa %s13, 0
    %15 = vsyncpa [#allocation9], 0
    %16 = vsyncpa [#allocation4], 0
    %s17 = scalar_lea.sflag [#allocation4], 1
    %18 = vsyncpa %s17, 0
    loop: start=0, step=1, limit=4
    $region2: #{tpu_custom_call.1} parent=1 // loop_pre_header
      _
    $region3: #{tpu_custom_call.1} parent=1 // loop_header
      %s20 = sphi 0, %s24
      %p21 = scmp.ge.s32.totalorder %s20, 4
      %s30 = sphi 0, %s32
      %s33 = sphi 0, %s30
      %s34 = sphi 0, %s33
      %s50 = sphi 0, %s34
      %s56 = sphi 0, %s58
      %s59 = sphi 0, %s56
      %s60 = sphi 0, %s59
      %s76 = sphi 0, %s60
      %s82 = sphi 0, %s84
      %s85 = sphi 0, %s82
      %s86 = sphi 0, %s85
      %s102 = sphi 0, %s86
      %s106 = sphi 0, %s106
      %s108 = sphi 0, %s106
      %s109 = sphi 0, %s108
      %s123 = sphi 0, %s109
      %s129 = sphi 0, %s131
      %s132 = sphi 0, %s129
      %s133 = sphi 0, %s132
      %s149 = sphi 0, %s133
    $region4: #{tpu_custom_call.1} parent=1 // loop_header_branch
      %23 = sbr.rel (%p21) target = $region8
    $region5: #{tpu_custom_call.1} parent=1 // loop_body
      %s25 = ssub.s32 %s20, 1
      %s26 = ssub.s32 %s20, 2
      %s27 = sadd.s32 %s20, 1
      %s28 = ssub.s32 %s20, %s27
      %p29 = scmp.eq.s32.totalorder %s28, 0
      %s31 = sadd.s32 %s30, 1
      %s32 = scalar_select %p29, %s30, %s31
      %p35 = pneg %p29
      %p36 = scmp.eq.s32.totalorder %s20, 1
      %p37 = por %p35, %p36
      %p38 = scmp.ne.s32.totalorder %s30, %s33
      %p39 = scmp.eq.s32.totalorder %s20, 0
      %p40 = por %p38, %p39
      %p41 = scmp.ne.s32.totalorder %s30, %s33
      %p42 = scmp.eq.s32.totalorder %s25, 1
      %p43 = por %p41, %p42
      %p44 = scmp.ne.s32.totalorder %s33, %s34
      %p45 = scmp.eq.s32.totalorder %s25, 0
      %p46 = por %p44, %p45
      %p47 = scmp.ne.s32.totalorder %s33, %s34
      %p48 = scmp.eq.s32.totalorder %s26, 1
      %p49 = por %p47, %p48
      %p51 = scmp.ne.s32.totalorder %s34, %s50
      %p52 = scmp.eq.s32.totalorder %s26, 0
      %p53 = por %p51, %p52
      %s54 = ssub.s32 %s20, %s27
      %p55 = scmp.eq.s32.totalorder %s54, 0
      %s57 = sadd.s32 %s56, 1
      %s58 = scalar_select %p55, %s56, %s57
      %p61 = pneg %p55
      %p62 = scmp.eq.s32.totalorder %s20, 1
      %p63 = por %p61, %p62
      %p64 = scmp.ne.s32.totalorder %s56, %s59
      %p65 = scmp.eq.s32.totalorder %s20, 0
      %p66 = por %p64, %p65
      %p67 = scmp.ne.s32.totalorder %s56, %s59
      %p68 = scmp.eq.s32.totalorder %s25, 1
      %p69 = por %p67, %p68
      %p70 = scmp.ne.s32.totalorder %s59, %s60
      %p71 = scmp.eq.s32.totalorder %s25, 0
      %p72 = por %p70, %p71
      %p73 = scmp.ne.s32.totalorder %s59, %s60
      %p74 = scmp.eq.s32.totalorder %s26, 1
      %p75 = por %p73, %p74
      %p77 = scmp.ne.s32.totalorder %s60, %s76
      %p78 = scmp.eq.s32.totalorder %s26, 0
      %p79 = por %p77, %p78
      %s80 = ssub.s32 %s20, %s27
      %p81 = scmp.eq.s32.totalorder %s80, 0
      %s83 = sadd.s32 %s82, 1
      %s84 = scalar_select %p81, %s82, %s83
      %p87 = pneg %p81
      %p88 = scmp.eq.s32.totalorder %s20, 1
      %p89 = por %p87, %p88
      %p90 = scmp.ne.s32.totalorder %s82, %s85
      %p91 = scmp.eq.s32.totalorder %s20, 0
      %p92 = por %p90, %p91
      %p93 = scmp.ne.s32.totalorder %s82, %s85
      %p94 = scmp.eq.s32.totalorder %s25, 1
      %p95 = por %p93, %p94
      %p96 = scmp.ne.s32.totalorder %s85, %s86
      %p97 = scmp.eq.s32.totalorder %s25, 0
      %p98 = por %p96, %p97
      %p99 = scmp.ne.s32.totalorder %s85, %s86
      %p100 = scmp.eq.s32.totalorder %s26, 1
      %p101 = por %p99, %p100
      %p103 = scmp.ne.s32.totalorder %s86, %s102
      %p104 = scmp.eq.s32.totalorder %s26, 0
      %p105 = por %p103, %p104
      %s107 = sadd.s32 %s106, 1
      %p110 = scmp.eq.s32.totalorder %s20, 1
      %p111 = scmp.ne.s32.totalorder %s106, %s108
      %p112 = scmp.eq.s32.totalorder %s20, 0
      %p113 = por %p111, %p112
      %p114 = scmp.ne.s32.totalorder %s106, %s108
      %p115 = scmp.eq.s32.totalorder %s25, 1
      %p116 = por %p114, %p115
      %p117 = scmp.ne.s32.totalorder %s108, %s109
      %p118 = scmp.eq.s32.totalorder %s25, 0
      %p119 = por %p117, %p118
      %p120 = scmp.ne.s32.totalorder %s108, %s109
      %p121 = scmp.eq.s32.totalorder %s26, 1
      %p122 = por %p120, %p121
      %p124 = scmp.ne.s32.totalorder %s109, %s123
      %p125 = scmp.eq.s32.totalorder %s26, 0
      %p126 = por %p124, %p125
      %s127 = ssub.s32 %s20, %s27
      %p128 = scmp.eq.s32.totalorder %s127, 0
      %s130 = sadd.s32 %s129, 1
      %s131 = scalar_select %p128, %s129, %s130
      %p134 = pneg %p128
      %p135 = scmp.eq.s32.totalorder %s20, 1
      %p136 = por %p134, %p135
      %p137 = scmp.ne.s32.totalorder %s129, %s132
      %p138 = scmp.eq.s32.totalorder %s20, 0
      %p139 = por %p137, %p138
      %p140 = scmp.ne.s32.totalorder %s129, %s132
      %p141 = scmp.eq.s32.totalorder %s25, 1
      %p142 = por %p140, %p141
      %p143 = scmp.ne.s32.totalorder %s132, %s133
      %p144 = scmp.eq.s32.totalorder %s25, 0
      %p145 = por %p143, %p144
      %p146 = scmp.ne.s32.totalorder %s132, %s133
      %p147 = scmp.eq.s32.totalorder %s26, 1
      %p148 = por %p146, %p147
      %p150 = scmp.ne.s32.totalorder %s133, %s149
      %p151 = scmp.eq.s32.totalorder %s26, 0
      %p152 = por %p150, %p151
      %p153 = scmp.le.s32.totalorder 1, %s20
      %p154 = scmp.lt.s32.totalorder %s20, 3
      %p155 = pnand %p153, %p154
      %p156 = pneg %p155
      // Predicated region
      $region9: #{tpu_custom_call.1} parent=5 // pred_check
        _
      $region10: #{tpu_custom_call.1} parent=5 // pred_check_branch
        %158 = sbr.rel (%p155) target = $region12
      $region11: #{tpu_custom_call.1} parent=5 // pred_region
        %s159 = ssub.s32 %s20, 1
        // Predicated region
        $region13: #{tpu_custom_call.1} parent=11 // pred_check
          %p160 = pneg %p119
        $region14: #{tpu_custom_call.1} parent=11 // pred_check_branch
          %162 = sbr.rel (%p160) target = $region16
        $region15: #{tpu_custom_call.1} parent=11 // pred_region
          %164 = vsyncadd [#allocation9], 0
          %s166 = sshll.u32 %s3, 4
          %s167 = int_to_ptr.hbm [resolvable:$true] %s166
          %s168 = sshll.u32 [#allocation8], 4
          %s169 = int_to_ptr.vmem [resolvable:$true] %s168
          %171 = dma.hbm_to_vmem [thread:$0]  %s167, 128, %s169, [#allocation9]
        $region16: #{tpu_custom_call.1} parent=11 // pred_fallthru
          _
      $region12: #{tpu_custom_call.1} parent=5 // pred_fallthru
        _
      %p172 = scmp.lt.s32.totalorder %s20, 2
      // Predicated region
      $region17: #{tpu_custom_call.1} parent=5 // pred_check
        %p173 = pneg %p172
      $region18: #{tpu_custom_call.1} parent=5 // pred_check_branch
        %175 = sbr.rel (%p173) target = $region20
      $region19: #{tpu_custom_call.1} parent=5 // pred_region
        // Predicated region
        $region21: #{tpu_custom_call.1} parent=19 // pred_check
          %p176 = pneg %p40
        $region22: #{tpu_custom_call.1} parent=19 // pred_check_branch
          %178 = sbr.rel (%p176) target = $region24
        $region23: #{tpu_custom_call.1} parent=19 // pred_region
          %s179 = sand.u32 %s30, 1
          %s180 = scalar_lea.sflag [#allocation3], %s179
          %s181 = sand.u32 %s30, 1
          %s182 = smul.addr %s181, 8
          %s183 = scalar_lea.vmem [#allocation2], %s182
          %185 = vsyncadd %s180, 0
          %s186 = smul.addr %s20, 8
          %s187 = scalar_lea.hbm %s0, %s186
          %s189 = sshll.u32 %s187, 4
          %s190 = int_to_ptr.hbm [resolvable:$true] %s189
          %s191 = sshll.u32 %s183, 4
          %s192 = int_to_ptr.vmem [resolvable:$true] %s191
          %194 = dma.hbm_to_vmem [thread:$0]  %s190, 128, %s192, %s180
        $region24: #{tpu_custom_call.1} parent=19 // pred_fallthru
          _
        // Predicated region
        $region25: #{tpu_custom_call.1} parent=19 // pred_check
          %p195 = pneg %p66
        $region26: #{tpu_custom_call.1} parent=19 // pred_check_branch
          %197 = sbr.rel (%p195) target = $region28
        $region27: #{tpu_custom_call.1} parent=19 // pred_region
          %s198 = sand.u32 %s20, 1
          %s199 = scalar_lea.sflag [#allocation6], %s198
          %s200 = sand.u32 %s56, 1
          %s201 = smul.addr %s200, 8
          %s202 = scalar_lea.vmem [#allocation5], %s201
          %204 = vsyncadd %s199, 0
          %s205 = smul.addr %s20, 8
          %s206 = scalar_lea.hbm %s1, %s205
          %s208 = sshll.u32 %s206, 4
          %s209 = int_to_ptr.hbm [resolvable:$true] %s208
          %s210 = sshll.u32 %s202, 4
          %s211 = int_to_ptr.vmem [resolvable:$true] %s210
          %213 = dma.hbm_to_vmem [thread:$0]  %s209, 128, %s211, %s199
        $region28: #{tpu_custom_call.1} parent=19 // pred_fallthru
          _
        // Predicated region
        $region29: #{tpu_custom_call.1} parent=19 // pred_check
          %p214 = pneg %p92
        $region30: #{tpu_custom_call.1} parent=19 // pred_check_branch
          %216 = sbr.rel (%p214) target = $region32
        $region31: #{tpu_custom_call.1} parent=19 // pred_region
          %s217 = sand.u32 %s20, 1
          %s218 = scalar_lea.sflag [#allocation6], %s217
          %s219 = sand.u32 %s82, 1
          %s220 = smul.addr %s219, 8
          %s221 = scalar_lea.vmem [#allocation7], %s220
          %223 = vsyncadd %s218, 0
          %s224 = smul.addr %s20, 8
          %s225 = scalar_lea.hbm %s2, %s224
          %s227 = sshll.u32 %s225, 4
          %s228 = int_to_ptr.hbm [resolvable:$true] %s227
          %s229 = sshll.u32 %s221, 4
          %s230 = int_to_ptr.vmem [resolvable:$true] %s229
          %232 = dma.hbm_to_vmem [thread:$0]  %s228, 128, %s230, %s218
        $region32: #{tpu_custom_call.1} parent=19 // pred_fallthru
          _
      $region20: #{tpu_custom_call.1} parent=5 // pred_fallthru
        _
      %p233 = scmp.le.s32.totalorder 1, %s20
      %p234 = scmp.lt.s32.totalorder %s20, 3
      %p235 = pnand %p233, %p234
      %p236 = pneg %p235
      // Predicated region
      $region33: #{tpu_custom_call.1} parent=5 // pred_check
        _
      $region34: #{tpu_custom_call.1} parent=5 // pred_check_branch
        %238 = sbr.rel (%p235) target = $region36
      $region35: #{tpu_custom_call.1} parent=5 // pred_region
        %s239 = ssub.s32 %s20, 1
        %s240 = sand.u32 %s33, 1
        %s241 = scalar_lea.sflag [#allocation3], %s240
        %s242 = sand.u32 %s33, 1
        %s243 = smul.addr %s242, 8
        %s244 = scalar_lea.vmem [#allocation2], %s243
        // Predicated region
        $region37: #{tpu_custom_call.1} parent=35 // pred_check
          %p245 = pneg %p46
        $region38: #{tpu_custom_call.1} parent=35 // pred_check_branch
          %247 = sbr.rel (%p245) target = $region40
        $region39: #{tpu_custom_call.1} parent=35 // pred_region
          %249 = dma.done %s241, 128
        $region40: #{tpu_custom_call.1} parent=35 // pred_fallthru
          _
        %s250 = sand.u32 %s25, 1
        %s251 = scalar_lea.sflag [#allocation6], %s250
        %s252 = sand.u32 %s59, 1
        %s253 = smul.addr %s252, 8
        %s254 = scalar_lea.vmem [#allocation5], %s253
        // Predicated region
        $region41: #{tpu_custom_call.1} parent=35 // pred_check
          %p255 = pneg %p72
        $region42: #{tpu_custom_call.1} parent=35 // pred_check_branch
          %257 = sbr.rel (%p255) target = $region44
        $region43: #{tpu_custom_call.1} parent=35 // pred_region
          %259 = dma.done %s251, 128
        $region44: #{tpu_custom_call.1} parent=35 // pred_fallthru
          _
        %s260 = sand.u32 %s25, 1
        %s261 = scalar_lea.sflag [#allocation6], %s260
        %s262 = sand.u32 %s85, 1
        %s263 = smul.addr %s262, 8
        %s264 = scalar_lea.vmem [#allocation7], %s263
        // Predicated region
        $region45: #{tpu_custom_call.1} parent=35 // pred_check
          %p265 = pneg %p98
        $region46: #{tpu_custom_call.1} parent=35 // pred_check_branch
          %267 = sbr.rel (%p265) target = $region48
        $region47: #{tpu_custom_call.1} parent=35 // pred_region
          %269 = dma.done %s261, 128
        $region48: #{tpu_custom_call.1} parent=35 // pred_fallthru
          _
        // Predicated region
        $region49: #{tpu_custom_call.1} parent=35 // pred_check
          %p270 = pneg %p119
        $region50: #{tpu_custom_call.1} parent=35 // pred_check_branch
          %272 = sbr.rel (%p270) target = $region52
        $region51: #{tpu_custom_call.1} parent=35 // pred_region
          %274 = dma.done [#allocation9], 128
        $region52: #{tpu_custom_call.1} parent=35 // pred_fallthru
          _
        %s275 = sand.u32 %s33, 1
        %s276 = scalar_lea.sflag [#allocation3], %s275
        %s277 = sand.u32 %s33, 1
        %s278 = smul.addr %s277, 8
        %s279 = scalar_lea.vmem [#allocation2], %s278
        %p280 = pneg %p46
        %p281 = pneg %p43
        %s282 = sand.u32 %s25, 1
        %s283 = scalar_lea.sflag [#allocation6], %s282
        %s284 = sand.u32 %s59, 1
        %s285 = smul.addr %s284, 8
        %s286 = scalar_lea.vmem [#allocation5], %s285
        %p287 = pneg %p72
        %p288 = pneg %p69
        %s289 = sand.u32 %s25, 1
        %s290 = scalar_lea.sflag [#allocation6], %s289
        %s291 = sand.u32 %s85, 1
        %s292 = smul.addr %s291, 8
        %s293 = scalar_lea.vmem [#allocation7], %s292
        %p294 = pneg %p98
        %p295 = pneg %p95
        %p296 = pneg %p119
        %p297 = pneg %p116
        %p298 = pneg %p145
        %p299 = pneg %p142
        %s300 = sand.u32 %s132, 1
        %s301 = scalar_lea.sflag [#allocation4], %s300
        %s302 = sand.u32 %s132, 1
        %s303 = smul.addr %s302, 8
        %s304 = scalar_lea.vmem [#allocation10], %s303
        %v305 = vld [vmem:[%s244] sm:$0xff]
        %v306 = vmul.f32 %v305, 0.17677669
        %v307 = vld [vmem:[%s254] sm:$0xff]
        %v308 = vld [vmem:[%s264] sm:$0xff]
        %v309 = vld [vmem:[#allocation8] sm:$0xff]
        %vm310 = vcmp.eq.f32.partialorder %v309, 0.0
        %vm311 = vcmask 64512
        %v313 = vsel %vm311, %v306, 0
        %v316 = vsel %vm311, %v307, 0
        %318 = vmatpush.xpose.msra.mxu0 0.0
        %319 = vmatpush.xpose.msra.mxu0 0.0
        %320 = vmatpush.xpose.msra.mxu0 0.0
        %321 = vmatpush.xpose.msra.mxu0 0.0
        %322 = vmatpush.xpose.msra.mxu0 0.0
        %323 = vmatpush.xpose.msra.mxu0 0.0
        %324 = vmatpush.xpose.msra.mxu0 0.0
        %325 = vmatpush.xpose.msra.mxu0 0.0
        %326 = vmatpush.xpose.msra.mxu0 0.0
        %327 = vmatpush.xpose.msra.mxu0 0.0
        %328 = vmatpush.xpose.msra.mxu0 0.0
        %329 = vmatpush.xpose.msra.mxu0 0.0
        %330 = vmatpush.xpose.msra.mxu0 0.0
        %331 = vmatpush.xpose.msra.mxu0 0.0
        %332 = vmatpush.xpose.msra.mxu0 0.0
        %333 = vmatpush.xpose.msra.mxu0 %v316
        %334 = vmatmul.f32.gmra.mxu0 %v313
        %v335 = vpop.f32.mrf.mxu0
        %v336 = vadd.f32 0.0, %v335
        %337 = vdwg.mxu0
        %v338 = vsel %vm310, -1e+20, %v336
        %v339 = vsel %vm311, %v338, -inf
        %340 = vmax.xlane.f32.xlu0 %v339
        %v341 = vpop.xlane.xlu0 %340
        %v342 = vsub.f32 %v338, %v341
        %v343 = vmul.f32 %v342, 1.442695
        %v344 = vpow.pop %v343
        %v345 = vsel %vm311, %v344, 0.0
        %346 = vadd.xlane.f32.xlu0 %v345
        %v347 = vpop.xlane.xlu0 %346
        %v349 = vsel %vm311, %v344, 0
        %351 = vmatpush.msra.mxu0 0.0
        %352 = vmatpush.msra.mxu0 0.0
        %353 = vmatpush.msra.mxu0 0.0
        %354 = vmatpush.msra.mxu0 0.0
        %355 = vmatpush.msra.mxu0 0.0
        %356 = vmatpush.msra.mxu0 0.0
        %357 = vmatpush.msra.mxu0 0.0
        %358 = vmatpush.msra.mxu0 0.0
        %359 = vmatpush.msra.mxu0 0.0
        %360 = vmatpush.msra.mxu0 0.0
        %361 = vmatpush.msra.mxu0 0.0
        %362 = vmatpush.msra.mxu0 0.0
        %363 = vmatpush.msra.mxu0 0.0
        %364 = vmatpush.msra.mxu0 0.0
        %365 = vmatpush.msra.mxu0 0.0
        %366 = vmatpush.msra.mxu0 %v308
        %367 = vmatmul.f32.gmra.mxu0 %v349
        %v368 = vpop.f32.mrf.mxu0
        %v369 = vadd.f32 0.0, %v368
        %370 = vdwg.mxu0
        %v371 = vrcp.pop %v347
        %v372 = vmul.f32 %v347, %v371
        %v373 = vsub.f32 1.0, %v372
        %v374 = vmul.f32 %v371, %v373
        %v375 = vadd.f32 %v371, %v374
        %vm376 = vweird.f32 %v347
        %vm377 = vweird.f32 %v371
        %vm378 = vmor %vm376, %vm377
        %v379 = vsel %vm378, %v371, %v375
        %v380 = vand.u32 2147483647, %v347
        %vm381 = vcmp.eq.f32.partialorder %v380, 8.507059e+37
        %v382 = vand.u32 %v347, 2147483648
        %v383 = vor.u32 1.1754944e-38, %v382
        %v384 = vsel %vm381, %v383, %v379
        %v385 = vmul.f32 %v369, %v384
        %386 = vrot.lane.b32.xlu0 %v306, 120
        %v387 = vpop.permute.xlu0 %386
        %388 = vrot.lane.b32.xlu0 %v307, 120
        %v389 = vpop.permute.xlu0 %388
        %v390 = vsel %vm311, %v387, 0
        %v392 = vsel %vm311, %v389, 0
        %394 = vmatpush.xpose.msra.mxu0 0.0
        %395 = vmatpush.xpose.msra.mxu0 0.0
        %396 = vmatpush.xpose.msra.mxu0 0.0
        %397 = vmatpush.xpose.msra.mxu0 0.0
        %398 = vmatpush.xpose.msra.mxu0 0.0
        %399 = vmatpush.xpose.msra.mxu0 0.0
        %400 = vmatpush.xpose.msra.mxu0 0.0
        %401 = vmatpush.xpose.msra.mxu0 0.0
        %402 = vmatpush.xpose.msra.mxu0 0.0
        %403 = vmatpush.xpose.msra.mxu0 0.0
        %404 = vmatpush.xpose.msra.mxu0 0.0
        %405 = vmatpush.xpose.msra.mxu0 0.0
        %406 = vmatpush.xpose.msra.mxu0 0.0
        %407 = vmatpush.xpose.msra.mxu0 0.0
        %408 = vmatpush.xpose.msra.mxu0 0.0
        %409 = vmatpush.xpose.msra.mxu0 %v392
        %410 = vmatmul.f32.gmra.mxu0 %v390
        %v411 = vpop.f32.mrf.mxu0
        %v412 = vadd.f32 0.0, %v411
        %413 = vdwg.mxu0
        %v414 = vsel %vm310, -1e+20, %v412
        %v415 = vsel %vm311, %v414, -inf
        %416 = vmax.xlane.f32.xlu0 %v415
        %v417 = vpop.xlane.xlu0 %416
        %v418 = vsub.f32 %v414, %v417
        %v419 = vmul.f32 %v418, 1.442695
        %v420 = vpow.pop %v419
        %v421 = vsel %vm311, %v420, 0.0
        %422 = vadd.xlane.f32.xlu0 %v421
        %v423 = vpop.xlane.xlu0 %422
        %425 = vrot.lane.b32.xlu0 %v308, 120
        %v426 = vpop.permute.xlu0 %425
        %v429 = vsel %vm311, %v420, 0
        %431 = vmatpush.msra.mxu0 0.0
        %432 = vmatpush.msra.mxu0 0.0
        %433 = vmatpush.msra.mxu0 0.0
        %434 = vmatpush.msra.mxu0 0.0
        %435 = vmatpush.msra.mxu0 0.0
        %436 = vmatpush.msra.mxu0 0.0
        %437 = vmatpush.msra.mxu0 0.0
        %438 = vmatpush.msra.mxu0 0.0
        %439 = vmatpush.msra.mxu0 0.0
        %440 = vmatpush.msra.mxu0 0.0
        %441 = vmatpush.msra.mxu0 0.0
        %442 = vmatpush.msra.mxu0 0.0
        %443 = vmatpush.msra.mxu0 0.0
        %444 = vmatpush.msra.mxu0 0.0
        %445 = vmatpush.msra.mxu0 0.0
        %446 = vmatpush.msra.mxu0 %v426
        %447 = vmatmul.f32.gmra.mxu0 %v429
        %v448 = vpop.f32.mrf.mxu0
        %v449 = vadd.f32 0.0, %v448
        %450 = vdwg.mxu0
        %v451 = vrcp.pop %v423
        %v452 = vmul.f32 %v423, %v451
        %v453 = vsub.f32 1.0, %v452
        %v454 = vmul.f32 %v451, %v453
        %v455 = vadd.f32 %v451, %v454
        %vm456 = vweird.f32 %v423
        %vm457 = vweird.f32 %v451
        %vm458 = vmor %vm456, %vm457
        %v459 = vsel %vm458, %v451, %v455
        %v460 = vand.u32 2147483647, %v423
        %vm461 = vcmp.eq.f32.partialorder %v460, 8.507059e+37
        %v462 = vand.u32 %v423, 2147483648
        %v463 = vor.u32 1.1754944e-38, %v462
        %v464 = vsel %vm461, %v463, %v459
        %v465 = vmul.f32 %v449, %v464
        %466 = vrot.lane.b32.xlu0 %v306, 112
        %v467 = vpop.permute.xlu0 %466
        %468 = vrot.lane.b32.xlu0 %v307, 112
        %v469 = vpop.permute.xlu0 %468
        %v470 = vsel %vm311, %v467, 0
        %v472 = vsel %vm311, %v469, 0
        %474 = vmatpush.xpose.msra.mxu0 0.0
        %475 = vmatpush.xpose.msra.mxu0 0.0
        %476 = vmatpush.xpose.msra.mxu0 0.0
        %477 = vmatpush.xpose.msra.mxu0 0.0
        %478 = vmatpush.xpose.msra.mxu0 0.0
        %479 = vmatpush.xpose.msra.mxu0 0.0
        %480 = vmatpush.xpose.msra.mxu0 0.0
        %481 = vmatpush.xpose.msra.mxu0 0.0
        %482 = vmatpush.xpose.msra.mxu0 0.0
        %483 = vmatpush.xpose.msra.mxu0 0.0
        %484 = vmatpush.xpose.msra.mxu0 0.0
        %485 = vmatpush.xpose.msra.mxu0 0.0
        %486 = vmatpush.xpose.msra.mxu0 0.0
        %487 = vmatpush.xpose.msra.mxu0 0.0
        %488 = vmatpush.xpose.msra.mxu0 0.0
        %489 = vmatpush.xpose.msra.mxu0 %v472
        %490 = vmatmul.f32.gmra.mxu0 %v470
        %v491 = vpop.f32.mrf.mxu0
        %v492 = vadd.f32 0.0, %v491
        %493 = vdwg.mxu0
        %v494 = vsel %vm310, -1e+20, %v492
        %v495 = vsel %vm311, %v494, -inf
        %496 = vmax.xlane.f32.xlu0 %v495
        %v497 = vpop.xlane.xlu0 %496
        %v498 = vsub.f32 %v494, %v497
        %v499 = vmul.f32 %v498, 1.442695
        %v500 = vpow.pop %v499
        %v501 = vsel %vm311, %v500, 0.0
        %502 = vadd.xlane.f32.xlu0 %v501
        %v503 = vpop.xlane.xlu0 %502
        %504 = vrot.lane.b32.xlu0 %v308, 112
        %v505 = vpop.permute.xlu0 %504
        %v508 = vsel %vm311, %v500, 0
        %510 = vmatpush.msra.mxu0 0.0
        %511 = vmatpush.msra.mxu0 0.0
        %512 = vmatpush.msra.mxu0 0.0
        %513 = vmatpush.msra.mxu0 0.0
        %514 = vmatpush.msra.mxu0 0.0
        %515 = vmatpush.msra.mxu0 0.0
        %516 = vmatpush.msra.mxu0 0.0
        %517 = vmatpush.msra.mxu0 0.0
        %518 = vmatpush.msra.mxu0 0.0
        %519 = vmatpush.msra.mxu0 0.0
        %520 = vmatpush.msra.mxu0 0.0
        %521 = vmatpush.msra.mxu0 0.0
        %522 = vmatpush.msra.mxu0 0.0
        %523 = vmatpush.msra.mxu0 0.0
        %524 = vmatpush.msra.mxu0 0.0
        %525 = vmatpush.msra.mxu0 %v505
        %526 = vmatmul.f32.gmra.mxu0 %v508
        %v527 = vpop.f32.mrf.mxu0
        %v528 = vadd.f32 0.0, %v527
        %529 = vdwg.mxu0
        %v530 = vrcp.pop %v503
        %v531 = vmul.f32 %v503, %v530
        %v532 = vsub.f32 1.0, %v531
        %v533 = vmul.f32 %v530, %v532
        %v534 = vadd.f32 %v530, %v533
        %vm535 = vweird.f32 %v503
        %vm536 = vweird.f32 %v530
        %vm537 = vmor %vm535, %vm536
        %v538 = vsel %vm537, %v530, %v534
        %v539 = vand.u32 2147483647, %v503
        %vm540 = vcmp.eq.f32.partialorder %v539, 8.507059e+37
        %v541 = vand.u32 %v503, 2147483648
        %v542 = vor.u32 1.1754944e-38, %v541
        %v543 = vsel %vm540, %v542, %v538
        %v544 = vmul.f32 %v528, %v543
        %545 = vrot.lane.b32.xlu0 %v306, 104
        %v546 = vpop.permute.xlu0 %545
        %547 = vrot.lane.b32.xlu0 %v307, 104
        %v548 = vpop.permute.xlu0 %547
        %v549 = vsel %vm311, %v546, 0
        %v551 = vsel %vm311, %v548, 0
        %553 = vmatpush.xpose.msra.mxu0 0.0
        %554 = vmatpush.xpose.msra.mxu0 0.0
        %555 = vmatpush.xpose.msra.mxu0 0.0
        %556 = vmatpush.xpose.msra.mxu0 0.0
        %557 = vmatpush.xpose.msra.mxu0 0.0
        %558 = vmatpush.xpose.msra.mxu0 0.0
        %559 = vmatpush.xpose.msra.mxu0 0.0
        %560 = vmatpush.xpose.msra.mxu0 0.0
        %561 = vmatpush.xpose.msra.mxu0 0.0
        %562 = vmatpush.xpose.msra.mxu0 0.0
        %563 = vmatpush.xpose.msra.mxu0 0.0
        %564 = vmatpush.xpose.msra.mxu0 0.0
        %565 = vmatpush.xpose.msra.mxu0 0.0
        %566 = vmatpush.xpose.msra.mxu0 0.0
        %567 = vmatpush.xpose.msra.mxu0 0.0
        %568 = vmatpush.xpose.msra.mxu0 %v551
        %569 = vmatmul.f32.gmra.mxu0 %v549
        %v570 = vpop.f32.mrf.mxu0
        %v571 = vadd.f32 0.0, %v570
        %572 = vdwg.mxu0
        %v573 = vsel %vm310, -1e+20, %v571
        %v574 = vsel %vm311, %v573, -inf
        %575 = vmax.xlane.f32.xlu0 %v574
        %v576 = vpop.xlane.xlu0 %575
        %v577 = vsub.f32 %v573, %v576
        %v578 = vmul.f32 %v577, 1.442695
        %v579 = vpow.pop %v578
        %v580 = vsel %vm311, %v579, 0.0
        %581 = vadd.xlane.f32.xlu0 %v580
        %v582 = vpop.xlane.xlu0 %581
        %583 = vrot.lane.b32.xlu0 %v308, 104
        %v584 = vpop.permute.xlu0 %583
        %v587 = vsel %vm311, %v579, 0
        %589 = vmatpush.msra.mxu0 0.0
        %590 = vmatpush.msra.mxu0 0.0
        %591 = vmatpush.msra.mxu0 0.0
        %592 = vmatpush.msra.mxu0 0.0
        %593 = vmatpush.msra.mxu0 0.0
        %594 = vmatpush.msra.mxu0 0.0
        %595 = vmatpush.msra.mxu0 0.0
        %596 = vmatpush.msra.mxu0 0.0
        %597 = vmatpush.msra.mxu0 0.0
        %598 = vmatpush.msra.mxu0 0.0
        %599 = vmatpush.msra.mxu0 0.0
        %600 = vmatpush.msra.mxu0 0.0
        %601 = vmatpush.msra.mxu0 0.0
        %602 = vmatpush.msra.mxu0 0.0
        %603 = vmatpush.msra.mxu0 0.0
        %604 = vmatpush.msra.mxu0 %v584
        %605 = vmatmul.f32.gmra.mxu0 %v587
        %v606 = vpop.f32.mrf.mxu0
        %v607 = vadd.f32 0.0, %v606
        %608 = vdwg.mxu0
        %v609 = vrcp.pop %v582
        %v610 = vmul.f32 %v582, %v609
        %v611 = vsub.f32 1.0, %v610
        %v612 = vmul.f32 %v609, %v611
        %v613 = vadd.f32 %v609, %v612
        %vm614 = vweird.f32 %v582
        %vm615 = vweird.f32 %v609
        %vm616 = vmor %vm614, %vm615
        %v617 = vsel %vm616, %v609, %v613
        %v618 = vand.u32 2147483647, %v582
        %vm619 = vcmp.eq.f32.partialorder %v618, 8.507059e+37
        %v620 = vand.u32 %v582, 2147483648
        %v621 = vor.u32 1.1754944e-38, %v620
        %v622 = vsel %vm619, %v621, %v617
        %v623 = vmul.f32 %v607, %v622
        %625 = vrot.lane.b32.xlu0 %v465, 8
        %v626 = vpop.permute.xlu0 %625
        %629 = vrot.lane.b32.xlu0 %v544, 16
        %v630 = vpop.permute.xlu0 %629
        %633 = vrot.lane.b32.xlu0 %v623, 24
        %v634 = vpop.permute.xlu0 %633
        %v636 = vsel %vm311, %v385, %v626
        %vm637 = vcmask 130048
        %v638 = vsel %vm637, %v636, %v630
        %vm639 = vcmask 195584
        %v640 = vsel %vm639, %v638, %v634
        %vm641 = vcmask 261120
        %642 = vst.msk [vmem:[%s304] sm:$0xff] %vm641, %v640
        %s643 = sand.u32 %s132, 1
        %s644 = scalar_lea.sflag [#allocation4], %s643
        %s645 = sand.u32 %s132, 1
        %s646 = smul.addr %s645, 8
        %s647 = scalar_lea.vmem [#allocation10], %s646
        // Predicated region
        $region53: #{tpu_custom_call.1} parent=35 // pred_check
          %p648 = pneg %p142
        $region54: #{tpu_custom_call.1} parent=35 // pred_check_branch
          %650 = sbr.rel (%p648) target = $region56
        $region55: #{tpu_custom_call.1} parent=35 // pred_region
          %652 = vsyncadd %s644, 0
          %s653 = smul.addr %s25, 8
          %s654 = scalar_lea.hbm %s4, %s653
          %s656 = sshll.u32 %s647, 4
          %s657 = int_to_ptr.vmem [resolvable:$true] %s656
          %s658 = sshll.u32 %s654, 4
          %s659 = int_to_ptr.hbm [resolvable:$true] %s658
          %661 = dma.vmem_to_hbm [thread:$0]  %s657, 128, %s659, %s644
        $region56: #{tpu_custom_call.1} parent=35 // pred_fallthru
          _
      $region36: #{tpu_custom_call.1} parent=5 // pred_fallthru
        _
      %p662 = scmp.le.s32.totalorder 2, %s20
      // Predicated region
      $region57: #{tpu_custom_call.1} parent=5 // pred_check
        %p663 = pneg %p662
      $region58: #{tpu_custom_call.1} parent=5 // pred_check_branch
        %665 = sbr.rel (%p663) target = $region60
      $region59: #{tpu_custom_call.1} parent=5 // pred_region
        %s666 = ssub.s32 %s20, 2
        // Predicated region
        $region61: #{tpu_custom_call.1} parent=59 // pred_check
          %p667 = pneg %p148
        $region62: #{tpu_custom_call.1} parent=59 // pred_check_branch
          %669 = sbr.rel (%p667) target = $region64
        $region63: #{tpu_custom_call.1} parent=59 // pred_region
          %s670 = sand.u32 %s133, 1
          %s671 = scalar_lea.sflag [#allocation4], %s670
          %s672 = sand.u32 %s133, 1
          %s673 = smul.addr %s672, 8
          %s674 = scalar_lea.vmem [#allocation10], %s673
          %676 = dma.done %s671, 128
        $region64: #{tpu_custom_call.1} parent=59 // pred_fallthru
          _
      $region60: #{tpu_custom_call.1} parent=5 // pred_fallthru
        _
    $region6: #{tpu_custom_call.1} parent=1 // loop_footer
      %s24 = sadd.s32 1, %s20
    $region7: #{tpu_custom_call.1} parent=1 // loop_footer_branch
      %19 = sbr.rel target = $region3
    $region8: #{tpu_custom_call.1} parent=1 // loop_exit
      _
    %677 = vsyncpa [#allocation3], 1
    %s678 = scalar_lea.sflag [#allocation3], 1
    %679 = vsyncpa %s678, 1
    %680 = vsyncpa [#allocation6], 1
    %s681 = scalar_lea.sflag [#allocation6], 1
    %682 = vsyncpa %s681, 1
    %683 = vsyncpa [#allocation9], 1
    %684 = vsyncpa [#allocation4], 1
    %s685 = scalar_lea.sflag [#allocation4], 1
    %686 = vsyncpa %s685, 1

</llo_original>
